<compile_context>
chip_gen: v5e
topology: v5e:2x2
jax: 0.10.0
libtpu: 0.0.40
codegen_flags: <defaults>
</compile_context>

<pallas_src>
import jax
import jax.numpy as jnp
import numpy as np
from jax.experimental import pallas as pl
from jax.experimental.pallas import tpu as pltpu


def _copy_kernel(x_ref, o_ref):
    # Pure tile copy VMEM -> VMEM; no extra math on the store path.
    o_ref[...] = x_ref[...]


def _derive_block_rows(rows, cols, itemsize, max_tile_bytes):
    """Largest row-block that (a) divides rows, (b) is a multiple of the
    dtype's sublane packing minimum, and (c) keeps the tile <= max_tile_bytes.
    Returns None if no valid tiling exists (caller falls back to one block)."""
    min_rows = max(8, 32 // itemsize)  # f32 -> 8, bf16 -> 16, int8/fp8 -> 32
    if rows % min_rows != 0 or cols % 128 != 0:
        return None
    best = None
    r = min_rows
    while r <= rows:
        if rows % r == 0 and r * cols * itemsize <= max_tile_bytes:
            best = r
        r += min_rows
    return best


def _identity_smoke_test(x, *, max_tile_bytes=2 << 20, small_bytes=256 << 10):
    """Optional tiled identity round-trip (HBM -> VMEM -> HBM).

    NOT used by UserDefinedLayer.forward(); exists only to exercise the TPU
    Pallas path once in __main__.
    """
    rows, cols = x.shape
    itemsize = x.dtype.itemsize
    nbytes = rows * cols * itemsize
    cost = pl.CostEstimate(flops=0, transcendentals=0, bytes_accessed=2 * nbytes)
    out_shape = jax.ShapeDtypeStruct((rows, cols), x.dtype)

    block_rows = None
    if nbytes > small_bytes:
        block_rows = _derive_block_rows(rows, cols, itemsize, max_tile_bytes)

    if block_rows is None or block_rows == rows:
        # Tiny (or untileable) array: single unblocked copy, no grid.
        return pl.pallas_call(
            _copy_kernel,
            out_shape=out_shape,
            cost_estimate=cost,
        )(x)

    # Tiled path: full-width, lane-dense blocks; in/out specs intentionally
    # identical (same block shape + index map).
    block_shape = (block_rows, cols)
    index_map = lambda i: (i, 0)
    grid = (rows // block_rows,)
    return pl.pallas_call(
        _copy_kernel,
        out_shape=out_shape,
        grid=grid,
        in_specs=[pl.BlockSpec(block_shape, index_map)],
        out_specs=pl.BlockSpec(block_shape, index_map),
        compiler_params=pltpu.CompilerParams(
            dimension_semantics=("parallel",),
        ),
        cost_estimate=cost,
    )(x)


class UserDefinedLayer:
    """JAX analogue of the PyTorch module.

    __init__ creates no parameters; forward() takes no inputs and returns
    None, matching the reference semantics exactly.  forward() launches no
    kernels at all — zero work for zero computation.
    """

    def __init__(self):
        # No parameters (reference __init__ defines none).
        pass

    def forward(self):
        # Reference forward() body is `pass`; optimal lowering is no launch.
        return None

    __call__ = forward


if __name__ == "__main__":
    # The module forward — must return None, like the torch module.
    module = UserDefinedLayer()
    assert module.forward() is None
    assert module() is None

    key = jax.random.PRNGKey(0)
    k1, k2 = jax.random.split(key)

    # 1) Tiny input: exercises the single-block (no-grid) Pallas path.
    x_small = jax.random.normal(k1, (16, 128), dtype=jnp.float32)
    x_small_host = np.asarray(x_small)  # host copy taken BEFORE the call
    y_small = _identity_smoke_test(x_small)
    jax.block_until_ready(y_small)
    assert y_small.shape == x_small.shape and y_small.dtype == x_small.dtype
    assert np.array_equal(np.asarray(y_small), x_small_host)

    # 2) Modest 8 MiB input: exercises the tiled grid path
    #    (block_rows = 1024 -> (1024, 512) f32 tiles of 2 MiB, grid = (4,)).
    x_big = jax.random.normal(k2, (4096, 512), dtype=jnp.float32)
    x_big_host = np.asarray(x_big)
    y_big = _identity_smoke_test(x_big)
    jax.block_until_ready(y_big)
    assert y_big.shape == x_big.shape and y_big.dtype == x_big.dtype
    assert np.array_equal(np.asarray(y_big), x_big_host)

    print("KERNEL_OK")
</pallas_src>

<mosaic_0001>
module attributes {stable_mosaic.version = 11 : i64} {
  func.func @_copy_kernel(%arg0: memref<16x128xf32, #tpu.memory_space<vmem>>, %arg1: memref<16x128xf32, #tpu.memory_space<vmem>>) attributes {dimension_semantics = [], scalar_prefetch = 0 : i64, scratch_operands = 0 : i64, tpu.core_type = #tpu.core_type<tc>} {
    %c0 = arith.constant 0 : index
    %c0_0 = arith.constant 0 : index
    %0 = vector.load %arg0[%c0, %c0_0] : memref<16x128xf32, #tpu.memory_space<vmem>>, vector<16x128xf32>
    %c0_1 = arith.constant 0 : index
    %c0_2 = arith.constant 0 : index
    %1 = vector.load %arg1[%c0_1, %c0_2] : memref<16x128xf32, #tpu.memory_space<vmem>>, vector<16x128xf32>
    tpu.vector_store %arg1[%c0_1, %c0_2], %0 {strides = array<i32>} : memref<16x128xf32, #tpu.memory_space<vmem>>, vector<16x128xf32>,
    return
  }
}

</mosaic_0001>

<llo_original>
// kernel: tpu_custom_call.1
$region0: #{tpu_custom_call.1}
  #allocation0 [shape = 'u32[]', space=smem, size = 0x4, offset = 0x4, fixed_abs, tag = 'smem constant byte address 0x4 - core index']
  #allocation1 [shape = 'u32[72,128]{1,0:T(1,128)}', space=vmem, size = 0x9000, scoped, tag = 'internal scratch']
  %s0 = inlined_call_operand.hbm [shape: f32[16,128], index: 0, kind: input, shape index: {}]
  %s1 = inlined_call_operand.hbm [shape: f32[16,128], index: 1, kind: output, shape index: {}]
  %s2 = sld [smem:[#allocation0]]
  $region18: #{tpu_custom_call.1} parent=0
    _
  %s4 = ssub.s32 1, %s2
  %s5 = scalar_select 0, %s4, %s2
  $region1: #{tpu_custom_call.1} parent=0
    #allocation2 [shape = 'u8[8192]{0}', space=vmem, size = 0x2000, scoped, tag = 'input window, operand 0, single buffered']
    #allocation3 [shape = 's32[1]{0}', space=sflag, size = 0x4, scoped, tag = 'scoped memory for tpu_custom_call.1']
    #allocation4 [shape = 's32[1]{0}', space=sflag, size = 0x4, scoped, tag = 'scoped memory for tpu_custom_call.1']
    #allocation5 [shape = 'u8[8192]{0}', space=vmem, size = 0x2000, scoped, tag = 'output window, operand 0, single buffered']
    %6 = vsyncpa [#allocation3], 0
    %7 = vsyncpa [#allocation4], 0
    // Predicated region
    $region2: #{tpu_custom_call.1} parent=1 // pred_check
      _
    $region3: #{tpu_custom_call.1} parent=1 // pred_check_branch
      %9 = sbr.rel (0) target = $region5
    $region4: #{tpu_custom_call.1} parent=1 // pred_region
      %11 = vsyncadd [#allocation3], 0
      %s12 = sshll.u32 %s0, 4
      %s13 = int_to_ptr.hbm [resolvable:$true] %s12
      %s14 = sshll.u32 [#allocation2], 4
      %s15 = int_to_ptr.vmem [resolvable:$true] %s14
      %20 = dma.hbm_to_vmem [thread:$0]  %s13, 256, %s15, [#allocation3], 128, 128, 8
    $region5: #{tpu_custom_call.1} parent=1 // pred_fallthru
      _
    // Predicated region
    $region6: #{tpu_custom_call.1} parent=1 // pred_check
      _
    $region7: #{tpu_custom_call.1} parent=1 // pred_check_branch
      %22 = sbr.rel (0) target = $region9
    $region8: #{tpu_custom_call.1} parent=1 // pred_region
      %24 = dma.done [#allocation3], 256
    $region9: #{tpu_custom_call.1} parent=1 // pred_fallthru
      _
    %v25 = vld [vmem:[#allocation2] sm:$0xff]
    %v26 = vld [vmem:[#allocation2 + $0x8] sm:$0xff]
    %27 = vst [vmem:[#allocation5] sm:$0xff] %v25
    %28 = vst [vmem:[#allocation5 + $0x8] sm:$0xff] %v26
    // Predicated region
    $region10: #{tpu_custom_call.1} parent=1 // pred_check
      _
    $region11: #{tpu_custom_call.1} parent=1 // pred_check_branch
      %30 = sbr.rel (0) target = $region13
    $region12: #{tpu_custom_call.1} parent=1 // pred_region
      %32 = vsyncadd [#allocation4], 0
      %s33 = sshll.u32 [#allocation5], 4
      %s34 = int_to_ptr.vmem [resolvable:$true] %s33
      %s35 = sshll.u32 %s1, 4
      %s36 = int_to_ptr.hbm [resolvable:$true] %s35
      %41 = dma.vmem_to_hbm [thread:$0]  %s34, 256, %s36, [#allocation4], 128, 128, 8
    $region13: #{tpu_custom_call.1} parent=1 // pred_fallthru
      _
    // Predicated region
    $region14: #{tpu_custom_call.1} parent=1 // pred_check
      _
    $region15: #{tpu_custom_call.1} parent=1 // pred_check_branch
      %43 = sbr.rel (0) target = $region17
    $region16: #{tpu_custom_call.1} parent=1 // pred_region
      %45 = dma.done [#allocation4], 256
    $region17: #{tpu_custom_call.1} parent=1 // pred_fallthru
      _
    %46 = vsyncpa [#allocation3], 1
    %47 = vsyncpa [#allocation4], 1

</llo_original>
